<compile_context>
chip_gen: v7x
topology: tpu7x:2x2x1
jax: 0.10.0
libtpu: 0.0.40
codegen_flags: <defaults>
</compile_context>

<pallas_src>
import jax
import jax.numpy as jnp
import numpy as np
from jax.experimental import pallas as pl
from jax.experimental.pallas import tpu as pltpu


def _round_up(x, m):
    return ((x + m - 1) // m) * m


def _cdiv(a, b):
    return -(-a // b)


def _sgcn_fused_kernel(x_ref, w_ref, b_ref, o_ref):
    """One grid step: out_tile = relu(x_tile @ W_tile + b_tile).

    x_ref: (bm, Fin)     input rows (Cin*V flattened), bf16/f32
    w_ref: (Fin, tn)     fused conv+adjacency weight column slab (resident per j)
    b_ref: (1, tn)       fused bias slab (f32)
    o_ref: (bm, tn)      lane-dense output tile
    """
    y = jnp.dot(x_ref[...], w_ref[...], preferred_element_type=jnp.float32)
    y = y + b_ref[...]
    o_ref[...] = jnp.maximum(y, 0.0).astype(o_ref.dtype)


def sgcn_forward(x, A, weight, bias, *, block_m=1024, compute_dtype=jnp.bfloat16,
                 vmem_budget_frac=0.6):
    """x: (N, C, T, V) f32, A: (K, V, V), weight: (K*C, C), bias: (K*C,)."""
    N, C, T, V = x.shape
    K = A.shape[0]
    Cin = C
    M = N * T
    Fin, Fout = Cin * V, C * V

    # ---- one-off fusion of 1x1 conv + adjacency + bias into a single GEMM weight ----
    # TODO(synk): for C >= 128 dispatch to a two-stage path (conv1x1 GEMM followed by the
    # adjacency GEMM) to avoid the (C*V)^2 fused weight and its ~6-9x MXU FLOP inflation;
    # also hoist/cache Wf when the module weights are static instead of rebuilding per call.
    a32 = A.astype(jnp.float32)
    w_k = weight.reshape(K, C, Cin).astype(jnp.float32)          # [k, c, ci]
    Wf = jnp.einsum('kci,kvw->ivcw', w_k, a32).reshape(Fin, Fout)
    bf = jnp.einsum('kc,kvw->cw', bias.reshape(K, C).astype(jnp.float32),
                    a32).reshape(Fout)

    out_dtype = x.dtype
    Fout_p = _round_up(Fout, 128)        # lane-dense output stores
    M8 = _round_up(M, 8)                 # sublane alignment only (no block_m padding)

    xb = jnp.dtype(compute_dtype).itemsize
    wb = jnp.dtype(compute_dtype).itemsize
    ob = jnp.dtype(out_dtype).itemsize

    # ---- VMEM-budgeted tile selection -------------------------------------------------
    phys_vmem = 64 * 1024 * 1024                       # conservative fallback (v7x)
    try:
        phys_vmem = int(pltpu.get_tpu_info().vmem_capacity_bytes)
    except Exception:
        pass
    budget = min(48 * 1024 * 1024, int(phys_vmem * vmem_budget_frac))

    # Output-column tile: keep the (double-buffered) weight slab within half the budget.
    tn = Fout_p
    while tn > 128 and 2 * Fin * tn * wb > budget // 2:
        tn = _round_up(tn // 2, 128)

    fixed = 2 * Fin * tn * wb + 2 * tn * 4             # weight + bias (double-buffered)
    per_row = 2 * Fin * xb + 2 * tn * ob + tn * 4      # x, out (dbl-buffered) + f32 acc
    bm = (budget - fixed) // per_row
    bm = max(8, min(block_m, M8, (bm // 8) * 8))

    nj = _cdiv(Fout_p, tn)
    ni = _cdiv(M8, bm)
    if nj * ni < 2 and M8 > 8:                         # keep both v7x TensorCores fed
        bm = max(8, _round_up(_cdiv(M8, 2), 8))
        ni = _cdiv(M8, bm)

    total_vmem = fixed + bm * per_row
    vmem_limit = int(min(phys_vmem * 0.9,
                         max(16 * 1024 * 1024, total_vmem * 1.25 + (2 << 20))))

    # ---- layouts ----------------------------------------------------------------------
    # TODO(synk): in a full ST-GCN stack keep activations in the (N*T, C*V) layout between
    # blocks so the NCTV <-> (M, C*V) transposes (one HBM pass each way) disappear.
    x2d = jnp.transpose(x, (0, 2, 1, 3)).reshape(M, Fin)
    if M8 != M:
        x2d = jnp.pad(x2d, ((0, M8 - M), (0, 0)))
    x2d = x2d.astype(compute_dtype)
    Wf_p = jnp.pad(Wf, ((0, 0), (0, Fout_p - Fout))).astype(compute_dtype)
    bf_p = jnp.pad(bf, (0, Fout_p - Fout)).reshape(1, Fout_p)

    cost = pl.CostEstimate(
        flops=2 * M8 * Fin * Fout_p,
        transcendentals=0,
        bytes_accessed=int(nj * M8 * Fin * xb + Fin * Fout_p * wb
                           + M8 * Fout_p * ob + Fout_p * 4),
    )

    # Grid: j (Fout slab) outer so the weight slab stays resident across the inner row sweep.
    out2d = pl.pallas_call(
        _sgcn_fused_kernel,
        out_shape=jax.ShapeDtypeStruct((M8, Fout_p), out_dtype),
        grid_spec=pltpu.PrefetchScalarGridSpec(
            num_scalar_prefetch=0,
            grid=(nj, ni),
            in_specs=[
                pl.BlockSpec((bm, Fin), lambda j, i: (i, 0)),
                pl.BlockSpec((Fin, tn), lambda j, i: (0, j)),
                pl.BlockSpec((1, tn), lambda j, i: (0, j)),
            ],
            out_specs=pl.BlockSpec((bm, tn), lambda j, i: (i, j)),
        ),
        compiler_params=pltpu.CompilerParams(
            dimension_semantics=("parallel", "parallel"),
            vmem_limit_bytes=vmem_limit,
        ),
        cost_estimate=cost,
    )(x2d, Wf_p, bf_p)

    # Strip padding -> (N, T, C, V) -> (N, C, T, V)  (fuses into a single XLA copy).
    out = out2d[:M, :Fout].reshape(N, T, C, V)
    return jnp.transpose(out, (0, 2, 1, 3))


def sgcn_reference(x, A, weight, bias):
    """Pure-JAX reference matching the PyTorch module semantics."""
    N, C, T, V = x.shape
    K = A.shape[0]
    y = jnp.einsum('oc,nctv->notv', weight, x) + bias[None, :, None, None]
    y = y.reshape(N, K, C, T, V)
    out = jnp.einsum('nkctv,kvw->nctw', y, A)
    return jax.nn.relu(out)


if __name__ == "__main__":
    # Small shapes consistent with the module: N=2, C=4, T=16, V=16, K=3
    N, C, T, V, K = 2, 4, 16, 16, 3

    key = jax.random.PRNGKey(0)
    kx, ka, kw, kb = jax.random.split(key, 4)

    x = jax.random.normal(kx, (N, C, T, V), dtype=jnp.float32)
    A = jax.random.uniform(ka, (K, V, V), dtype=jnp.float32)
    weight = 0.1 * jax.random.normal(kw, (K * C, C), dtype=jnp.float32)
    bias = 0.01 * jax.random.normal(kb, (K * C,), dtype=jnp.float32)

    ref = jax.block_until_ready(sgcn_reference(x, A, weight, bias))

    # Exact f32 path (tight tolerance) — proves the fused-GEMM math.
    out_f32 = jax.block_until_ready(
        sgcn_forward(x, A, weight, bias, compute_dtype=jnp.float32))
    np.testing.assert_allclose(np.asarray(out_f32), np.asarray(ref),
                               rtol=1e-4, atol=1e-4)

    # Default fast path (bf16 MXU operands, f32 accumulation) — loose tolerance.
    out_bf16 = jax.block_until_ready(sgcn_forward(x, A, weight, bias))
    np.testing.assert_allclose(np.asarray(out_bf16), np.asarray(ref),
                               rtol=5e-2, atol=5e-2)

    print("KERNEL_OK")
</pallas_src>

<mosaic_0001>
module attributes {stable_mosaic.version = 11 : i64} {
  func.func @_sgcn_fused_kernel(%arg0: i32, %arg1: i32, %arg2: memref<16x64xf32, #tpu.memory_space<vmem>>, %arg3: memref<64x128xf32, #tpu.memory_space<vmem>>, %arg4: memref<1x128xf32, #tpu.memory_space<vmem>>, %arg5: memref<16x128xf32, #tpu.memory_space<vmem>>) attributes {dimension_semantics = [#tpu.dimension_semantics<parallel>, #tpu.dimension_semantics<parallel>], iteration_bounds = array<i64: 1, 2>, scalar_prefetch = 0 : i64, scratch_operands = 0 : i64, tpu.core_type = #tpu.core_type<tc>, window_params = [{transform_indices = @transform_0, window_bounds = array<i64: 16, 64>}, {transform_indices = @transform_1, window_bounds = array<i64: 64, 128>}, {transform_indices = @transform_2, window_bounds = array<i64: 1, 128>}, {transform_indices = @transform_3, window_bounds = array<i64: 16, 128>}]} {
    %c0 = arith.constant 0 : index
    %c0_0 = arith.constant 0 : index
    %0 = vector.load %arg2[%c0, %c0_0] : memref<16x64xf32, #tpu.memory_space<vmem>>, vector<16x64xf32>
    %c0_1 = arith.constant 0 : index
    %c0_2 = arith.constant 0 : index
    %1 = vector.load %arg3[%c0_1, %c0_2] : memref<64x128xf32, #tpu.memory_space<vmem>>, vector<64x128xf32>
    %cst = arith.constant dense<0.000000e+00> : vector<16x128xf32>
    %2 = tpu.matmul %0, %1, %cst {dimension_numbers = #tpu.dot_dimension_numbers<[1], [0], [0], [1], [0, 0, 1, 1], [], []>} : vector<16x64xf32>, vector<64x128xf32>, vector<16x128xf32> -> vector<16x128xf32>
    %c0_3 = arith.constant 0 : index
    %c0_4 = arith.constant 0 : index
    %3 = vector.load %arg4[%c0_3, %c0_4] : memref<1x128xf32, #tpu.memory_space<vmem>>, vector<1x128xf32>
    %4 = vector.broadcast %3 : vector<1x128xf32> to vector<16x128xf32>
    %5 = arith.addf %2, %4 : vector<16x128xf32>
    %cst_5 = arith.constant 0.000000e+00 : f32
    %6 = vector.broadcast %cst_5 : f32 to vector<16x128xf32>
    %7 = arith.maximumf %5, %6 : vector<16x128xf32>
    %c0_6 = arith.constant 0 : index
    %c0_7 = arith.constant 0 : index
    %8 = vector.load %arg5[%c0_6, %c0_7] : memref<16x128xf32, #tpu.memory_space<vmem>>, vector<16x128xf32>
    tpu.vector_store %arg5[%c0_6, %c0_7], %7 {strides = array<i32>} : memref<16x128xf32, #tpu.memory_space<vmem>>, vector<16x128xf32>,
    return
  }
  func.func @transform_0(%arg0: i32, %arg1: i32) -> (i32, i32) {
    %c0_i32 = arith.constant 0 : i32
    %c0_i32_0 = arith.constant 0 : i32
    return %arg1, %c0_i32 : i32, i32
  }
  func.func @transform_1(%arg0: i32, %arg1: i32) -> (i32, i32) {
    %c0_i32 = arith.constant 0 : i32
    %c0_i32_0 = arith.constant 0 : i32
    return %c0_i32, %arg0 : i32, i32
  }
  func.func @transform_2(%arg0: i32, %arg1: i32) -> (i32, i32) {
    %c0_i32 = arith.constant 0 : i32
    %c0_i32_0 = arith.constant 0 : i32
    return %c0_i32, %arg0 : i32, i32
  }
  func.func @transform_3(%arg0: i32, %arg1: i32) -> (i32, i32) {
    %c0_i32 = arith.constant 0 : i32
    return %arg1, %arg0 : i32, i32
  }
}

</mosaic_0001>

<llo_original>
// kernel: tpu_custom_call.1
$region0: #{tpu_custom_call.1}
  #allocation0 [shape = 'u32[]', space=smem, size = 0x4, offset = 0x4, fixed_abs, tag = 'smem constant byte address 0x4 - core index']
  #allocation1 [shape = 'u32[144,128]{1,0:T(1,128)}', space=vmem, size = 0x12000, scoped, tag = 'internal scratch']
  %s0 = inlined_call_operand.hbm [shape: f32[32,64], index: 0, kind: input, shape index: {}]
  %s1 = inlined_call_operand.hbm [shape: f32[64,128], index: 1, kind: input, shape index: {}]
  %s2 = inlined_call_operand.vmem [shape: f32[1,128], index: 2, kind: input, shape index: {}]
  %s3 = inlined_call_operand.hbm [shape: f32[32,128], index: 3, kind: output, shape index: {}]
  %s4 = sld [smem:[#allocation0]]
  $region53: #{tpu_custom_call.1} parent=0
    _
  %s6 = ssub.s32 1, %s4
  %s7 = scalar_select 0, %s6, %s4
  $region1: #{tpu_custom_call.1} parent=0
    #allocation2 [shape = 'u8[16384]{0}', space=vmem, size = 0x4000, scoped, tag = 'input window, operand 0']
    #allocation3 [shape = 's32[2]{0}', space=sflag, size = 0x8, scoped, tag = 'scoped memory for tpu_custom_call.1']
    #allocation4 [shape = 's32[2]{0}', space=sflag, size = 0x8, scoped, tag = 'scoped memory for tpu_custom_call.1']
    #allocation5 [shape = 'u8[32768]{0}', space=vmem, size = 0x8000, scoped, tag = 'input window, operand 1, single buffered']
    #allocation6 [shape = 's32[1]{0}', space=sflag, size = 0x4, scoped, tag = 'scoped memory for tpu_custom_call.1']
    #allocation7 [shape = 'u8[16384]{0}', space=vmem, size = 0x4000, scoped, tag = 'output window, operand 0']
    %8 = vsyncpa [#allocation3], 0
    %s9 = scalar_lea.sflag [#allocation3], 1
    %10 = vsyncpa %s9, 0
    %11 = vsyncpa [#allocation6], 0
    %12 = vsyncpa [#allocation4], 0
    %s13 = scalar_lea.sflag [#allocation4], 1
    %14 = vsyncpa %s13, 0
    loop: start=0, step=1, limit=4
    $region2: #{tpu_custom_call.1} parent=1 // loop_pre_header
      _
    $region3: #{tpu_custom_call.1} parent=1 // loop_header
      %s16 = sphi 0, %s20
      %p17 = scmp.ge.s32.totalorder %s16, 4
      %s23 = sphi 0, %s35
      %s24 = sphi 0, %s31
      %s25 = sphi 0, %s23
      %s26 = sphi 0, %s24
      %s27 = sphi 0, %s25
      %s28 = sphi 0, %s26
      %s38 = sphi 0, %s40
      %s41 = sphi 0, %s38
      %s42 = sphi 0, %s41
      %s58 = sphi 0, %s42
      %s64 = sphi 0, %s66
      %s67 = sphi 0, %s64
      %s68 = sphi 0, %s67
      %s84 = sphi 0, %s68
      %s90 = sphi 0, %s92
      %s93 = sphi 0, %s90
      %s94 = sphi 0, %s93
      %s110 = sphi 0, %s94
      %s118 = sphi 0, %s120
      %s121 = sphi 0, %s118
      %s122 = sphi 0, %s121
      %s138 = sphi 0, %s122
    $region4: #{tpu_custom_call.1} parent=1 // loop_header_branch
      %19 = sbr.rel (%p17) target = $region8
    $region5: #{tpu_custom_call.1} parent=1 // loop_body
      %s21 = ssub.s32 %s16, 1
      %s22 = ssub.s32 %s16, 2
      %s29 = sadd.s32 1, %s24
      %p30 = scmp.ge.s32.totalorder %s29, 2
      %s31 = scalar_select %p30, 0, %s29
      %s32 = sadd.s32 1, %s23
      %s33 = scalar_select %p30, %s32, %s23
      %p34 = scmp.ge.s32.totalorder %s33, 1
      %s35 = scalar_select %p34, 0, %s33
      %s36 = ssub.s32 %s24, %s31
      %p37 = scmp.eq.s32.totalorder %s36, 0
      %s39 = sadd.s32 %s38, 1
      %s40 = scalar_select %p37, %s38, %s39
      %p43 = pneg %p37
      %p44 = scmp.eq.s32.totalorder %s16, 1
      %p45 = por %p43, %p44
      %p46 = scmp.ne.s32.totalorder %s38, %s41
      %p47 = scmp.eq.s32.totalorder %s16, 0
      %p48 = por %p46, %p47
      %p49 = scmp.ne.s32.totalorder %s38, %s41
      %p50 = scmp.eq.s32.totalorder %s21, 1
      %p51 = por %p49, %p50
      %p52 = scmp.ne.s32.totalorder %s41, %s42
      %p53 = scmp.eq.s32.totalorder %s21, 0
      %p54 = por %p52, %p53
      %p55 = scmp.ne.s32.totalorder %s41, %s42
      %p56 = scmp.eq.s32.totalorder %s22, 1
      %p57 = por %p55, %p56
      %p59 = scmp.ne.s32.totalorder %s42, %s58
      %p60 = scmp.eq.s32.totalorder %s22, 0
      %p61 = por %p59, %p60
      %s62 = ssub.s32 %s23, %s35
      %p63 = scmp.eq.s32.totalorder %s62, 0
      %s65 = sadd.s32 %s64, 1
      %s66 = scalar_select %p63, %s64, %s65
      %p69 = pneg %p63
      %p70 = scmp.eq.s32.totalorder %s16, 1
      %p71 = por %p69, %p70
      %p72 = scmp.ne.s32.totalorder %s64, %s67
      %p73 = scmp.eq.s32.totalorder %s16, 0
      %p74 = por %p72, %p73
      %p75 = scmp.ne.s32.totalorder %s64, %s67
      %p76 = scmp.eq.s32.totalorder %s21, 1
      %p77 = por %p75, %p76
      %p78 = scmp.ne.s32.totalorder %s67, %s68
      %p79 = scmp.eq.s32.totalorder %s21, 0
      %p80 = por %p78, %p79
      %p81 = scmp.ne.s32.totalorder %s67, %s68
      %p82 = scmp.eq.s32.totalorder %s22, 1
      %p83 = por %p81, %p82
      %p85 = scmp.ne.s32.totalorder %s68, %s84
      %p86 = scmp.eq.s32.totalorder %s22, 0
      %p87 = por %p85, %p86
      %s88 = ssub.s32 %s23, %s35
      %p89 = scmp.eq.s32.totalorder %s88, 0
      %s91 = sadd.s32 %s90, 1
      %s92 = scalar_select %p89, %s90, %s91
      %p95 = pneg %p89
      %p96 = scmp.eq.s32.totalorder %s16, 1
      %p97 = por %p95, %p96
      %p98 = scmp.ne.s32.totalorder %s90, %s93
      %p99 = scmp.eq.s32.totalorder %s16, 0
      %p100 = por %p98, %p99
      %p101 = scmp.ne.s32.totalorder %s90, %s93
      %p102 = scmp.eq.s32.totalorder %s21, 1
      %p103 = por %p101, %p102
      %p104 = scmp.ne.s32.totalorder %s93, %s94
      %p105 = scmp.eq.s32.totalorder %s21, 0
      %p106 = por %p104, %p105
      %p107 = scmp.ne.s32.totalorder %s93, %s94
      %p108 = scmp.eq.s32.totalorder %s22, 1
      %p109 = por %p107, %p108
      %p111 = scmp.ne.s32.totalorder %s94, %s110
      %p112 = scmp.eq.s32.totalorder %s22, 0
      %p113 = por %p111, %p112
      %s114 = ssub.s32 %s24, %s31
      %s115 = ssub.s32 %s23, %s35
      %s116 = sor.u32 %s114, %s115
      %p117 = scmp.eq.s32.totalorder %s116, 0
      %s119 = sadd.s32 %s118, 1
      %s120 = scalar_select %p117, %s118, %s119
      %p123 = pneg %p117
      %p124 = scmp.eq.s32.totalorder %s16, 1
      %p125 = por %p123, %p124
      %p126 = scmp.ne.s32.totalorder %s118, %s121
      %p127 = scmp.eq.s32.totalorder %s16, 0
      %p128 = por %p126, %p127
      %p129 = scmp.ne.s32.totalorder %s118, %s121
      %p130 = scmp.eq.s32.totalorder %s21, 1
      %p131 = por %p129, %p130
      %p132 = scmp.ne.s32.totalorder %s121, %s122
      %p133 = scmp.eq.s32.totalorder %s21, 0
      %p134 = por %p132, %p133
      %p135 = scmp.ne.s32.totalorder %s121, %s122
      %p136 = scmp.eq.s32.totalorder %s22, 1
      %p137 = por %p135, %p136
      %p139 = scmp.ne.s32.totalorder %s122, %s138
      %p140 = scmp.eq.s32.totalorder %s22, 0
      %p141 = por %p139, %p140
      %p142 = scmp.le.s32.totalorder 1, %s16
      %p143 = scmp.lt.s32.totalorder %s16, 3
      %p144 = pnand %p142, %p143
      %p145 = pneg %p144
      // Predicated region
      $region9: #{tpu_custom_call.1} parent=5 // pred_check
        _
      $region10: #{tpu_custom_call.1} parent=5 // pred_check_branch
        %147 = sbr.rel (%p144) target = $region12
      $region11: #{tpu_custom_call.1} parent=5 // pred_region
        %s148 = ssub.s32 %s16, 1
        // Predicated region
        $region13: #{tpu_custom_call.1} parent=11 // pred_check
          %p149 = pneg %p80
        $region14: #{tpu_custom_call.1} parent=11 // pred_check_branch
          %151 = sbr.rel (%p149) target = $region16
        $region15: #{tpu_custom_call.1} parent=11 // pred_region
          %s153 = ssub.s32 1024, 1024
          %154 = vsyncadd [#allocation6], %s153
          %s155 = smul.addr %s25, 128
          %s156 = scalar_lea.hbm %s1, %s155
          %s157 = sshll.u32 [#allocation5], 4
          %s158 = int_to_ptr.vmem [resolvable:$true] %s157
          %163 = dma.hbm_to_vmem [thread:$0]  %s156, 1024, %s158, [#allocation6], 128, 128, 8
        $region16: #{tpu_custom_call.1} parent=11 // pred_fallthru
          _
        // Predicated region
        $region17: #{tpu_custom_call.1} parent=11 // pred_check
          %p164 = pneg %p106
        $region18: #{tpu_custom_call.1} parent=11 // pred_check_branch
          %166 = sbr.rel (%p164) target = $region20
        $region19: #{tpu_custom_call.1} parent=11 // pred_region
          %p167 = scmp.lt.s32.totalorder %s25, 0
          %s168 = scalar_select %p167, %s25, 0
          %s169 = scalar_lea.vmem %s2, %s168
        $region20: #{tpu_custom_call.1} parent=11 // pred_fallthru
          _
      $region12: #{tpu_custom_call.1} parent=5 // pred_fallthru
        _
      %p170 = scmp.lt.s32.totalorder %s16, 2
      // Predicated region
      $region21: #{tpu_custom_call.1} parent=5 // pred_check
        %p171 = pneg %p170
      $region22: #{tpu_custom_call.1} parent=5 // pred_check_branch
        %173 = sbr.rel (%p171) target = $region24
      $region23: #{tpu_custom_call.1} parent=5 // pred_region
        // Predicated region
        $region25: #{tpu_custom_call.1} parent=23 // pred_check
          %p174 = pneg %p48
        $region26: #{tpu_custom_call.1} parent=23 // pred_check_branch
          %176 = sbr.rel (%p174) target = $region28
        $region27: #{tpu_custom_call.1} parent=23 // pred_region
          %s177 = sand.u32 %s38, 1
          %s178 = scalar_lea.sflag [#allocation3], %s177
          %s179 = sand.u32 %s38, 1
          %s180 = smul.addr %s179, 16
          %s181 = scalar_lea.vmem [#allocation2], %s180
          %s182 = smul.u32 2, %s24
          %s184 = ssub.s32 256, 256
          %185 = vsyncadd %s178, %s184
          %s186 = smul.addr %s182, 128
          %s187 = scalar_lea.hbm %s0, %s186
          %s188 = sshll.u32 %s181, 4
          %s189 = int_to_ptr.vmem [resolvable:$true] %s188
          %194 = dma.hbm_to_vmem [thread:$0]  %s187, 256, %s189, %s178, 128, 128, 8
        $region28: #{tpu_custom_call.1} parent=23 // pred_fallthru
          _
      $region24: #{tpu_custom_call.1} parent=5 // pred_fallthru
        _
      %p195 = scmp.le.s32.totalorder 1, %s16
      %p196 = scmp.lt.s32.totalorder %s16, 3
      %p197 = pnand %p195, %p196
      %p198 = pneg %p197
      // Predicated region
      $region29: #{tpu_custom_call.1} parent=5 // pred_check
        _
      $region30: #{tpu_custom_call.1} parent=5 // pred_check_branch
        %200 = sbr.rel (%p197) target = $region32
      $region31: #{tpu_custom_call.1} parent=5 // pred_region
        %s201 = ssub.s32 %s16, 1
        %s202 = sand.u32 %s41, 1
        %s203 = scalar_lea.sflag [#allocation3], %s202
        %s204 = sand.u32 %s41, 1
        %s205 = smul.addr %s204, 16
        %s206 = scalar_lea.vmem [#allocation2], %s205
        // Predicated region
        $region33: #{tpu_custom_call.1} parent=31 // pred_check
          %p207 = pneg %p54
        $region34: #{tpu_custom_call.1} parent=31 // pred_check_branch
          %209 = sbr.rel (%p207) target = $region36
        $region35: #{tpu_custom_call.1} parent=31 // pred_region
          %210 = dma.done %s203, 256
        $region36: #{tpu_custom_call.1} parent=31 // pred_fallthru
          _
        // Predicated region
        $region37: #{tpu_custom_call.1} parent=31 // pred_check
          %p211 = pneg %p80
        $region38: #{tpu_custom_call.1} parent=31 // pred_check_branch
          %213 = sbr.rel (%p211) target = $region40
        $region39: #{tpu_custom_call.1} parent=31 // pred_region
          %214 = dma.done [#allocation6], 1024
        $region40: #{tpu_custom_call.1} parent=31 // pred_fallthru
          _
        %s215 = sand.u32 %s41, 1
        %s216 = scalar_lea.sflag [#allocation3], %s215
        %s217 = sand.u32 %s41, 1
        %s218 = smul.addr %s217, 16
        %s219 = scalar_lea.vmem [#allocation2], %s218
        %p220 = pneg %p54
        %p221 = pneg %p51
        %p222 = pneg %p80
        %p223 = pneg %p77
        %p224 = scmp.lt.s32.totalorder %s25, 0
        %s225 = scalar_select %p224, %s25, 0
        %s226 = scalar_lea.vmem %s2, %s225
        %p227 = pneg %p106
        %p228 = pneg %p103
        %p229 = pneg %p134
        %p230 = pneg %p131
        %s231 = sand.u32 %s121, 1
        %s232 = scalar_lea.sflag [#allocation4], %s231
        %s233 = sand.u32 %s121, 1
        %s234 = smul.addr %s233, 16
        %s235 = scalar_lea.vmem [#allocation7], %s234
        %s236 = smul.u32 2, %s26
        %p237 = scmp.lt.s32.totalorder %s25, 0
        %s238 = scalar_select %p237, %s25, 0
        %s239 = scalar_lea.vmem %s2, %s238
        %s240 = smul.u32 2, %s26
        %v241 = vld [vmem:[%s206] sm:$0xff]
        %v242 = vld [vmem:[%s206 + $0x8] sm:$0xff]
        %v243 = vld [vmem:[#allocation5] sm:$0xff]
        %v244 = vld [vmem:[#allocation5 + $0x8] sm:$0xff]
        %v245 = vld [vmem:[#allocation5 + $0x10] sm:$0xff]
        %v246 = vld [vmem:[#allocation5 + $0x18] sm:$0xff]
        %v247 = vld [vmem:[#allocation5 + $0x20] sm:$0xff]
        %v248 = vld [vmem:[#allocation5 + $0x28] sm:$0xff]
        %v249 = vld [vmem:[#allocation5 + $0x30] sm:$0xff]
        %v250 = vld [vmem:[#allocation5 + $0x38] sm:$0xff]
        %v251 = vld [vmem:[%s239] sm:$0x1]
        %v253 = vlaneseq
        %v254 = vshrl.u32 %v253, 7
        %v255 = vsub.s32 0, %v254
        %v256 = vrot.slane %v251, %v255
        %vm258 = vcmask 523264
        %v260 = vsel %vm258, %v241, 0
        %v263 = vsel %vm258, %v242, 0
        %265 = vmatprep.subr.mxu0 0.0
        %266 = vmatpush1.msra.mxu0 %v243
        %267 = vmatprep.subr.mxu0 0.0
        %268 = vmatpush1.msra.mxu0 %v244
        %269 = vmatprep.subr.mxu0 0.0
        %270 = vmatpush1.msra.mxu0 %v245
        %271 = vmatprep.subr.mxu0 0.0
        %272 = vmatpush1.msra.mxu0 %v246
        %273 = vmatprep.subr.mxu0 0.0
        %274 = vmatpush1.msra.mxu0 %v247
        %275 = vmatprep.subr.mxu0 0.0
        %276 = vmatpush1.msra.mxu0 %v248
        %277 = vmatprep.subr.mxu0 0.0
        %278 = vmatpush1.msra.mxu0 %v249
        %279 = vmatprep.subr.mxu0 0.0
        %280 = vmatpush1.msra.mxu0 %v250
        %281 = vmatprep.subr.mxu0 0.0
        %282 = vmatpush1.msra.mxu0 0.0
        %283 = vmatprep.subr.mxu0 0.0
        %284 = vmatpush1.msra.mxu0 0.0
        %285 = vmatprep.subr.mxu0 0.0
        %286 = vmatpush1.msra.mxu0 0.0
        %287 = vmatprep.subr.mxu0 0.0
        %288 = vmatpush1.msra.mxu0 0.0
        %289 = vmatprep.subr.mxu0 0.0
        %290 = vmatpush1.msra.mxu0 0.0
        %291 = vmatprep.subr.mxu0 0.0
        %292 = vmatpush1.msra.mxu0 0.0
        %293 = vmatprep.subr.mxu0 0.0
        %294 = vmatpush1.msra.mxu0 0.0
        %295 = vmatprep.subr.mxu0 0.0
        %296 = vmatpush1.msra.mxu0 0.0
        %297 = vmatprep.subr.mxu0 0.0
        %298 = vmatpush1.msra.mxu0 0.0
        %299 = vmatprep.subr.mxu0 0.0
        %300 = vmatpush1.msra.mxu0 0.0
        %301 = vmatprep.subr.mxu0 0.0
        %302 = vmatpush1.msra.mxu0 0.0
        %303 = vmatprep.subr.mxu0 0.0
        %304 = vmatpush1.msra.mxu0 0.0
        %305 = vmatprep.subr.mxu0 0.0
        %306 = vmatpush1.msra.mxu0 0.0
        %307 = vmatprep.subr.mxu0 0.0
        %308 = vmatpush1.msra.mxu0 0.0
        %309 = vmatprep.subr.mxu0 0.0
        %310 = vmatpush1.msra.mxu0 0.0
        %311 = vmatprep.subr.mxu0 0.0
        %312 = vmatpush1.msra.mxu0 0.0
        %313 = vmatprep.subr.mxu0 0.0
        %314 = vmatpush1.msra.mxu0 0.0
        %315 = vmatprep.subr.mxu0 0.0
        %316 = vmatpush1.msra.mxu0 0.0
        %317 = vmatprep.subr.mxu0 0.0
        %318 = vmatpush1.msra.mxu0 0.0
        %319 = vmatprep.subr.mxu0 0.0
        %320 = vmatpush1.msra.mxu0 0.0
        %321 = vmatprep.subr.mxu0 0.0
        %322 = vmatpush1.msra.mxu0 0.0
        %323 = vmatprep.subr.mxu0 0.0
        %324 = vmatpush1.msra.mxu0 0.0
        %325 = vmatprep.subr.mxu0 0.0
        %326 = vmatpush1.msra.mxu0 0.0
        %327 = vmatprep.subr.mxu0 0.0
        %328 = vmatpush1.msra.mxu0 0.0
        %329 = vmatprep.mubr.f32.mxu0 0.0
        %330 = vmatmul.mubr.f32.gmra.mrb[0].mxu0 %v260
        %v331 = vpop.f32.mrb[0].mxu0
        %v332 = vadd.f32 %v256, %v331
        %v333 = vpop.f32.mrb[0].mxu0
        %334 = vmatprep.mubr.f32.mxu0 0.0
        %335 = vmatmul.mubr.f32.gmra.mrb[0].mxu0 %v263
        %v336 = vpop.f32.mrb[0].mxu0
        %v337 = vadd.f32 %v256, %v336
        %v338 = vpop.f32.mrb[0].mxu0
        %339 = vdwg.mxu0
        %v340 = vmax.f32 %v332, 0.0
        %v341 = vmax.f32 %v337, 0.0
        %342 = vst [vmem:[%s235] sm:$0xff] %v340
        %343 = vst [vmem:[%s235 + $0x8] sm:$0xff] %v341
        %s344 = sand.u32 %s121, 1
        %s345 = scalar_lea.sflag [#allocation4], %s344
        %s346 = sand.u32 %s121, 1
        %s347 = smul.addr %s346, 16
        %s348 = scalar_lea.vmem [#allocation7], %s347
        // Predicated region
        $region41: #{tpu_custom_call.1} parent=31 // pred_check
          %p349 = pneg %p131
        $region42: #{tpu_custom_call.1} parent=31 // pred_check_branch
          %351 = sbr.rel (%p349) target = $region44
        $region43: #{tpu_custom_call.1} parent=31 // pred_region
          %s352 = smul.u32 2, %s26
          %s354 = ssub.s32 256, 256
          %355 = vsyncadd %s345, %s354
          %s356 = sadd.s32 %s25, %s352
          %s357 = smul.addr %s356, 128
          %s358 = scalar_lea.hbm %s3, %s357
          %s359 = sshll.u32 %s348, 4
          %s360 = int_to_ptr.vmem [resolvable:$true] %s359
          %365 = dma.vmem_to_hbm [thread:$0]  %s360, 256, %s358, %s345, 128, 128, 8
        $region44: #{tpu_custom_call.1} parent=31 // pred_fallthru
          _
      $region32: #{tpu_custom_call.1} parent=5 // pred_fallthru
        _
      %p366 = scmp.le.s32.totalorder 2, %s16
      // Predicated region
      $region45: #{tpu_custom_call.1} parent=5 // pred_check
        %p367 = pneg %p366
      $region46: #{tpu_custom_call.1} parent=5 // pred_check_branch
        %369 = sbr.rel (%p367) target = $region48
      $region47: #{tpu_custom_call.1} parent=5 // pred_region
        %s370 = ssub.s32 %s16, 2
        // Predicated region
        $region49: #{tpu_custom_call.1} parent=47 // pred_check
          %p371 = pneg %p137
        $region50: #{tpu_custom_call.1} parent=47 // pred_check_branch
          %373 = sbr.rel (%p371) target = $region52
        $region51: #{tpu_custom_call.1} parent=47 // pred_region
          %s374 = sand.u32 %s122, 1
          %s375 = scalar_lea.sflag [#allocation4], %s374
          %s376 = sand.u32 %s122, 1
          %s377 = smul.addr %s376, 16
          %s378 = scalar_lea.vmem [#allocation7], %s377
          %379 = dma.done %s375, 256
        $region52: #{tpu_custom_call.1} parent=47 // pred_fallthru
          _
      $region48: #{tpu_custom_call.1} parent=5 // pred_fallthru
        _
    $region6: #{tpu_custom_call.1} parent=1 // loop_footer
      %s20 = sadd.s32 1, %s16
    $region7: #{tpu_custom_call.1} parent=1 // loop_footer_branch
      %15 = sbr.rel target = $region3
    $region8: #{tpu_custom_call.1} parent=1 // loop_exit
      _
    %380 = vsyncpa [#allocation3], 1
    %s381 = scalar_lea.sflag [#allocation3], 1
    %382 = vsyncpa %s381, 1
    %383 = vsyncpa [#allocation6], 1
    %384 = vsyncpa [#allocation4], 1
    %s385 = scalar_lea.sflag [#allocation4], 1
    %386 = vsyncpa %s385, 1

</llo_original>
